<compile_context>
chip_gen: v6e
topology: v6e:2x2x1
jax: 0.10.0
libtpu: 0.0.40
codegen_flags: <defaults>
</compile_context>

<pallas_src>
import jax
import jax.numpy as jnp
from jax.experimental import pallas as pl
from jax.experimental.pallas import tpu as pltpu

EPSILON = 1e-6

_LANE = 128
_SUBLANE = 8


def _round_up(x, m):
    return ((x + m - 1) // m) * m


def _cdiv(a, b):
    return (a + b - 1) // b


def _vmem_budgets():
    """Returns (input-tile VMEM budget, vmem_limit_bytes) per TPU generation."""
    try:
        cap = int(pltpu.get_tpu_info().vmem_capacity_bytes)
    except Exception:
        cap = 64 * 1024 * 1024  # conservative fallback if the query fails
    if cap >= 100 * 1024 * 1024:                 # v5e / v6e: 128 MiB physical
        return 40 * 1024 * 1024, 96 * 1024 * 1024
    return 16 * 1024 * 1024, 48 * 1024 * 1024    # v7x: 64 MiB per TensorCore


def _make_kernel(n, d, tile_n, tile_d, n_tiles_part, need_row_mask, need_col_mask):
    groups = tile_n // _SUBLANE

    def kernel(pivot_ref, pred_ref, targ_ref, s_c_ref, s_c2_ref, s_e_ref):
        p = pl.program_id(0)     # sample-range part (parallel)
        di = pl.program_id(1)    # feature block (parallel)
        ni = pl.program_id(2)    # sample tile within part (reduction, last)

        @pl.when(ni == 0)
        def _():
            s_c_ref[...] = jnp.zeros_like(s_c_ref)
            s_c2_ref[...] = jnp.zeros_like(s_c2_ref)
            s_e_ref[...] = jnp.zeros_like(s_e_ref)

        # Accumulate in f32 (required on v5e: no bf16 VALU; cheap elsewhere).
        pred = pred_ref[...].astype(jnp.float32)
        targ = targ_ref[...].astype(jnp.float32)
        pivot = pivot_ref[...].astype(jnp.float32)      # (1, tile_d) broadcast

        tc = targ - pivot        # pivot-shifted targets (numerical stability)
        df = pred - targ

        # Boundary masking (only emitted when the shapes actually need it):
        # zeroed elements are exactly neutral for all three accumulators.
        if need_row_mask or need_col_mask:
            valid = None
            if need_row_mask:
                row0 = (p * n_tiles_part + ni) * tile_n
                rows = row0 + jax.lax.broadcasted_iota(
                    jnp.int32, (tile_n, tile_d), 0)
                valid = rows < n
            if need_col_mask:
                cols = di * tile_d + jax.lax.broadcasted_iota(
                    jnp.int32, (tile_n, tile_d), 1)
                cmask = cols < d
                valid = cmask if valid is None else (valid & cmask)
            zero = jnp.float32(0.0)
            tc = jnp.where(valid, tc, zero)
            df = jnp.where(valid, df, zero)

        # Per-sublane partial sums: (tile_n, tile_d) -> (groups, 8, tile_d);
        # reducing the leading axis is plain vreg adds (no XLU in the hot loop).
        tc3 = tc.reshape(groups, _SUBLANE, tile_d)
        df3 = df.reshape(groups, _SUBLANE, tile_d)
        s_c_ref[...] += jnp.sum(tc3, axis=0, keepdims=True)
        s_c2_ref[...] += jnp.sum(tc3 * tc3, axis=0, keepdims=True)
        s_e_ref[...] += jnp.sum(df3 * df3, axis=0, keepdims=True)

    return kernel


def smooth_nse_loss(predictions, targets, epsilon=EPSILON, *, _force_tile_n=None):
    """predictions, targets: (N, D) float arrays. Returns scalar float32 loss."""
    assert predictions.shape == targets.shape
    assert predictions.ndim == 2
    n, d = predictions.shape

    # ---- feature (lane) tiling: contiguous full-width tiles for narrow D ----
    d_round = _round_up(d, _LANE)
    if d_round <= 1024:
        tile_d = d_round                      # one contiguous slab per row
    elif d_round % 512 == 0:
        tile_d = 512
    elif d_round % 256 == 0:
        tile_d = 256
    else:
        tile_d = _LANE
    num_d = _cdiv(d, tile_d)

    # ---- sample (sublane) tiling: biggest tile that fits the VMEM budget ----
    input_budget, vmem_limit = _vmem_budgets()
    itemsize = max(jnp.dtype(predictions.dtype).itemsize,
                   jnp.dtype(targets.dtype).itemsize)
    tile_n = input_budget // (4 * tile_d * itemsize)    # 2 inputs x 2 buffers
    tile_n = max(_SUBLANE, (tile_n // _SUBLANE) * _SUBLANE)
    tile_n = min(tile_n, _round_up(n, _SUBLANE))
    if _force_tile_n is not None:                       # small-shape test hook
        tile_n = min(tile_n, max(_SUBLANE, _round_up(_force_tile_n, _SUBLANE)))
    num_n = _cdiv(n, tile_n)

    # ---- split the sample range in two when D alone gives no parallelism ----
    num_parts = 2 if (num_d == 1 and num_n >= 2) else 1
    n_tiles_part = _cdiv(num_n, num_parts)
    last_n_block = num_n - 1

    need_row_mask = (num_parts * n_tiles_part * tile_n != n)
    need_col_mask = (d % tile_d != 0)

    kernel = _make_kernel(n, d, tile_n, tile_d, n_tiles_part,
                          need_row_mask, need_col_mask)

    def in_map(p, di, ni):
        # Clamp keeps any overhanging last tile of part p in bounds; its
        # contribution is fully zeroed by the in-kernel row mask.
        return (jnp.minimum(p * n_tiles_part + ni, last_n_block), di)

    d_out = num_d * tile_d
    part_shape = jax.ShapeDtypeStruct((num_parts, _SUBLANE, d_out), jnp.float32)
    out_spec = pl.BlockSpec((1, _SUBLANE, tile_d), lambda p, di, ni: (p, 0, di))

    pivot = targets[0:1, :]    # per-feature shift for the one-pass variance

    s_c, s_c2, s_e = pl.pallas_call(
        kernel,
        out_shape=(part_shape, part_shape, part_shape),
        grid_spec=pltpu.PrefetchScalarGridSpec(
            num_scalar_prefetch=0,
            grid=(num_parts, num_d, n_tiles_part),        # reduction axis last
            in_specs=[
                pl.BlockSpec((1, tile_d), lambda p, di, ni: (0, di)),   # pivot
                pl.BlockSpec((tile_n, tile_d), in_map),                 # pred
                pl.BlockSpec((tile_n, tile_d), in_map),                 # targ
            ],
            out_specs=(out_spec, out_spec, out_spec),
        ),
        compiler_params=pltpu.CompilerParams(
            dimension_semantics=("parallel", "parallel", "arbitrary"),
            vmem_limit_bytes=vmem_limit,
        ),
    )(pivot, predictions, targets)

    # Tiny finalize on (D,)-sized vectors: combine part/sublane partials, NSE.
    s_c = jnp.sum(s_c, axis=(0, 1))[:d]
    s_c2 = jnp.sum(s_c2, axis=(0, 1))[:d]
    s_e = jnp.sum(s_e, axis=(0, 1))[:d]
    n_f = jnp.float32(n)
    # sum((t-mean)^2) = sum((t-pivot)^2) - (sum(t-pivot))^2 / n ; clamp >= 0.
    var_sum = jnp.maximum(s_c2 - (s_c * s_c) / n_f, 0.0)
    nse = 1.0 - s_e / (var_sum + jnp.float32(epsilon))
    return -jnp.mean(nse)


def _reference(predictions, targets, epsilon=EPSILON):
    mean_observed = jnp.mean(targets, axis=0)
    numerator = jnp.sum((predictions - targets) ** 2, axis=0)
    denominator = jnp.sum((targets - mean_observed) ** 2, axis=0) + epsilon
    nse = 1.0 - numerator / denominator
    return -jnp.mean(nse)


if __name__ == "__main__":
    key = jax.random.PRNGKey(0)
    k1, k2, k3, k4, k5, k6 = jax.random.split(key, 6)

    # Aligned small shape (N samples, D features).
    N, D = 16, 128
    predictions = jax.random.normal(k1, (N, D), dtype=jnp.float32)
    targets = jax.random.normal(k2, (N, D), dtype=jnp.float32)
    loss = jax.block_until_ready(smooth_nse_loss(predictions, targets))
    ref = jax.block_until_ready(_reference(predictions, targets))
    assert jnp.allclose(loss, ref, rtol=1e-4, atol=1e-4), (loss, ref)

    # Ragged shape: exercises row + column boundary masking (no padding copies).
    predictions2 = jax.random.normal(k3, (50, 70), dtype=jnp.float32)
    targets2 = jax.random.normal(k4, (50, 70), dtype=jnp.float32)
    loss2 = jax.block_until_ready(smooth_nse_loss(predictions2, targets2))
    ref2 = jax.block_until_ready(_reference(predictions2, targets2))
    assert jnp.allclose(loss2, ref2, rtol=1e-4, atol=1e-4), (loss2, ref2)

    # Multi-tile + two-part split + large target offset: exercises the clamped
    # overhang tile, cross-part partial-sum combine, and pivot-shifted variance.
    predictions3 = jax.random.normal(k5, (100, 70), dtype=jnp.float32)
    targets3 = 100.0 + jax.random.normal(k6, (100, 70), dtype=jnp.float32)
    loss3 = jax.block_until_ready(
        smooth_nse_loss(predictions3, targets3, _force_tile_n=24))
    ref3 = jax.block_until_ready(_reference(predictions3, targets3))
    assert jnp.allclose(loss3, ref3, rtol=2e-3, atol=1e-3), (loss3, ref3)

    print("KERNEL_OK")
</pallas_src>

<mosaic_0001>
module attributes {stable_mosaic.version = 11 : i64} {
  func.func @kernel(%arg0: i32, %arg1: i32, %arg2: i32, %arg3: memref<1x128xf32, #tpu.memory_space<vmem>>, %arg4: memref<16x128xf32, #tpu.memory_space<vmem>>, %arg5: memref<16x128xf32, #tpu.memory_space<vmem>>, %arg6: memref<1x8x128xf32, #tpu.memory_space<vmem>>, %arg7: memref<1x8x128xf32, #tpu.memory_space<vmem>>, %arg8: memref<1x8x128xf32, #tpu.memory_space<vmem>>) attributes {dimension_semantics = [#tpu.dimension_semantics<parallel>, #tpu.dimension_semantics<parallel>, #tpu.dimension_semantics<arbitrary>], iteration_bounds = array<i64: 1, 1, 1>, scalar_prefetch = 0 : i64, scratch_operands = 0 : i64, tpu.core_type = #tpu.core_type<tc>, window_params = [{transform_indices = @transform_0, window_bounds = array<i64: 1, 128>}, {transform_indices = @transform_1, window_bounds = array<i64: 16, 128>}, {transform_indices = @transform_2, window_bounds = array<i64: 16, 128>}, {transform_indices = @transform_3, window_bounds = array<i64: 1, 8, 128>}, {transform_indices = @transform_4, window_bounds = array<i64: 1, 8, 128>}, {transform_indices = @transform_5, window_bounds = array<i64: 1, 8, 128>}]} {
    %c0_i32 = arith.constant 0 : i32
    %0 = arith.cmpi eq, %arg2, %c0_i32 : i32
    %1 = arith.extui %0 : i1 to i32
    %c0_i32_0 = arith.constant 0 : i32
    %2 = arith.cmpi ne, %1, %c0_i32_0 : i32
    scf.if %2 {
      %cst_26 = arith.constant 0.000000e+00 : f32
      %28 = vector.broadcast %cst_26 : f32 to vector<1x8x128xf32>
      %c0_27 = arith.constant 0 : index
      %c0_28 = arith.constant 0 : index
      %c0_29 = arith.constant 0 : index
      %29 = vector.load %arg6[%c0_27, %c0_28, %c0_29] : memref<1x8x128xf32, #tpu.memory_space<vmem>>, vector<1x8x128xf32>
      tpu.vector_store %arg6[%c0_27, %c0_28, %c0_29], %28 {strides = array<i32>} : memref<1x8x128xf32, #tpu.memory_space<vmem>>, vector<1x8x128xf32>,
      %cst_30 = arith.constant 0.000000e+00 : f32
      %30 = vector.broadcast %cst_30 : f32 to vector<1x8x128xf32>
      %c0_31 = arith.constant 0 : index
      %c0_32 = arith.constant 0 : index
      %c0_33 = arith.constant 0 : index
      %31 = vector.load %arg7[%c0_31, %c0_32, %c0_33] : memref<1x8x128xf32, #tpu.memory_space<vmem>>, vector<1x8x128xf32>
      tpu.vector_store %arg7[%c0_31, %c0_32, %c0_33], %30 {strides = array<i32>} : memref<1x8x128xf32, #tpu.memory_space<vmem>>, vector<1x8x128xf32>,
      %cst_34 = arith.constant 0.000000e+00 : f32
      %32 = vector.broadcast %cst_34 : f32 to vector<1x8x128xf32>
      %c0_35 = arith.constant 0 : index
      %c0_36 = arith.constant 0 : index
      %c0_37 = arith.constant 0 : index
      %33 = vector.load %arg8[%c0_35, %c0_36, %c0_37] : memref<1x8x128xf32, #tpu.memory_space<vmem>>, vector<1x8x128xf32>
      tpu.vector_store %arg8[%c0_35, %c0_36, %c0_37], %32 {strides = array<i32>} : memref<1x8x128xf32, #tpu.memory_space<vmem>>, vector<1x8x128xf32>,
    } else {
    }
    %c0 = arith.constant 0 : index
    %c0_1 = arith.constant 0 : index
    %3 = vector.load %arg4[%c0, %c0_1] : memref<16x128xf32, #tpu.memory_space<vmem>>, vector<16x128xf32>
    %c0_2 = arith.constant 0 : index
    %c0_3 = arith.constant 0 : index
    %4 = vector.load %arg5[%c0_2, %c0_3] : memref<16x128xf32, #tpu.memory_space<vmem>>, vector<16x128xf32>
    %c0_4 = arith.constant 0 : index
    %c0_5 = arith.constant 0 : index
    %5 = vector.load %arg3[%c0_4, %c0_5] : memref<1x128xf32, #tpu.memory_space<vmem>>, vector<1x128xf32>
    %6 = vector.broadcast %5 : vector<1x128xf32> to vector<16x128xf32>
    %7 = arith.subf %4, %6 : vector<16x128xf32>
    %8 = arith.subf %3, %4 : vector<16x128xf32>
    %9 = vector.shape_cast %7 : vector<16x128xf32> to vector<2x8x128xf32>
    %10 = vector.shape_cast %8 : vector<16x128xf32> to vector<2x8x128xf32>
    %c0_6 = arith.constant 0 : index
    %c0_7 = arith.constant 0 : index
    %c0_8 = arith.constant 0 : index
    %11 = vector.load %arg6[%c0_6, %c0_7, %c0_8] : memref<1x8x128xf32, #tpu.memory_space<vmem>>, vector<1x8x128xf32>
    %cst = arith.constant dense<0.000000e+00> : vector<8x128xf32>
    %12 = vector.multi_reduction <add>, %9, %cst [0] : vector<2x8x128xf32> to vector<8x128xf32>
    %13 = vector.shape_cast %12 : vector<8x128xf32> to vector<1x8x128xf32>
    %14 = arith.addf %11, %13 : vector<1x8x128xf32>
    %c0_9 = arith.constant 0 : index
    %c0_10 = arith.constant 0 : index
    %c0_11 = arith.constant 0 : index
    %15 = vector.load %arg6[%c0_9, %c0_10, %c0_11] : memref<1x8x128xf32, #tpu.memory_space<vmem>>, vector<1x8x128xf32>
    tpu.vector_store %arg6[%c0_9, %c0_10, %c0_11], %14 {strides = array<i32>} : memref<1x8x128xf32, #tpu.memory_space<vmem>>, vector<1x8x128xf32>,
    %c0_12 = arith.constant 0 : index
    %c0_13 = arith.constant 0 : index
    %c0_14 = arith.constant 0 : index
    %16 = vector.load %arg7[%c0_12, %c0_13, %c0_14] : memref<1x8x128xf32, #tpu.memory_space<vmem>>, vector<1x8x128xf32>
    %17 = arith.mulf %9, %9 : vector<2x8x128xf32>
    %cst_15 = arith.constant dense<0.000000e+00> : vector<8x128xf32>
    %18 = vector.multi_reduction <add>, %17, %cst_15 [0] : vector<2x8x128xf32> to vector<8x128xf32>
    %19 = vector.shape_cast %18 : vector<8x128xf32> to vector<1x8x128xf32>
    %20 = arith.addf %16, %19 : vector<1x8x128xf32>
    %c0_16 = arith.constant 0 : index
    %c0_17 = arith.constant 0 : index
    %c0_18 = arith.constant 0 : index
    %21 = vector.load %arg7[%c0_16, %c0_17, %c0_18] : memref<1x8x128xf32, #tpu.memory_space<vmem>>, vector<1x8x128xf32>
    tpu.vector_store %arg7[%c0_16, %c0_17, %c0_18], %20 {strides = array<i32>} : memref<1x8x128xf32, #tpu.memory_space<vmem>>, vector<1x8x128xf32>,
    %c0_19 = arith.constant 0 : index
    %c0_20 = arith.constant 0 : index
    %c0_21 = arith.constant 0 : index
    %22 = vector.load %arg8[%c0_19, %c0_20, %c0_21] : memref<1x8x128xf32, #tpu.memory_space<vmem>>, vector<1x8x128xf32>
    %23 = arith.mulf %10, %10 : vector<2x8x128xf32>
    %cst_22 = arith.constant dense<0.000000e+00> : vector<8x128xf32>
    %24 = vector.multi_reduction <add>, %23, %cst_22 [0] : vector<2x8x128xf32> to vector<8x128xf32>
    %25 = vector.shape_cast %24 : vector<8x128xf32> to vector<1x8x128xf32>
    %26 = arith.addf %22, %25 : vector<1x8x128xf32>
    %c0_23 = arith.constant 0 : index
    %c0_24 = arith.constant 0 : index
    %c0_25 = arith.constant 0 : index
    %27 = vector.load %arg8[%c0_23, %c0_24, %c0_25] : memref<1x8x128xf32, #tpu.memory_space<vmem>>, vector<1x8x128xf32>
    tpu.vector_store %arg8[%c0_23, %c0_24, %c0_25], %26 {strides = array<i32>} : memref<1x8x128xf32, #tpu.memory_space<vmem>>, vector<1x8x128xf32>,
    return
  }
  func.func @transform_0(%arg0: i32, %arg1: i32, %arg2: i32) -> (i32, i32) {
    %c0_i32 = arith.constant 0 : i32
    %c0_i32_0 = arith.constant 0 : i32
    return %c0_i32, %arg1 : i32, i32
  }
  func.func @transform_1(%arg0: i32, %arg1: i32, %arg2: i32) -> (i32, i32) {
    %c1_i32 = arith.constant 1 : i32
    %0 = arith.muli %arg0, %c1_i32 : i32
    %1 = arith.addi %0, %arg2 : i32
    %c0_i32 = arith.constant 0 : i32
    %2 = arith.minsi %1, %c0_i32 : i32
    %c0_i32_0 = arith.constant 0 : i32
    return %2, %arg1 : i32, i32
  }
  func.func @transform_2(%arg0: i32, %arg1: i32, %arg2: i32) -> (i32, i32) {
    %c1_i32 = arith.constant 1 : i32
    %0 = arith.muli %arg0, %c1_i32 : i32
    %1 = arith.addi %0, %arg2 : i32
    %c0_i32 = arith.constant 0 : i32
    %2 = arith.minsi %1, %c0_i32 : i32
    %c0_i32_0 = arith.constant 0 : i32
    return %2, %arg1 : i32, i32
  }
  func.func @transform_3(%arg0: i32, %arg1: i32, %arg2: i32) -> (i32, i32, i32) {
    %c0_i32 = arith.constant 0 : i32
    %c0_i32_0 = arith.constant 0 : i32
    return %arg0, %c0_i32, %arg1 : i32, i32, i32
  }
  func.func @transform_4(%arg0: i32, %arg1: i32, %arg2: i32) -> (i32, i32, i32) {
    %c0_i32 = arith.constant 0 : i32
    %c0_i32_0 = arith.constant 0 : i32
    return %arg0, %c0_i32, %arg1 : i32, i32, i32
  }
  func.func @transform_5(%arg0: i32, %arg1: i32, %arg2: i32) -> (i32, i32, i32) {
    %c0_i32 = arith.constant 0 : i32
    %c0_i32_0 = arith.constant 0 : i32
    return %arg0, %c0_i32, %arg1 : i32, i32, i32
  }
}

</mosaic_0001>

<llo_original>
// kernel: tpu_custom_call.1
$region0: #{tpu_custom_call.1}
  #allocation0 [shape = 'u32[]', space=smem, size = 0x4, offset = 0x4, fixed_abs, tag = 'smem constant byte address 0x4 - core index']
  #allocation1 [shape = 'u32[144,128]{1,0:T(1,128)}', space=vmem, size = 0x12000, scoped, tag = 'internal scratch']
  %s0 = inlined_call_operand.hbm [shape: f32[1,128], index: 0, kind: input, shape index: {}]
  %s1 = inlined_call_operand.hbm [shape: f32[16,128], index: 1, kind: input, shape index: {}]
  %s2 = inlined_call_operand.hbm [shape: f32[16,128], index: 2, kind: input, shape index: {}]
  %s3 = inlined_call_operand.hbm [shape: f32[1,8,128], index: 3, kind: output, shape index: {0}]
  %s4 = inlined_call_operand.hbm [shape: f32[1,8,128], index: 4, kind: output, shape index: {1}]
  %s5 = inlined_call_operand.hbm [shape: f32[1,8,128], index: 5, kind: output, shape index: {2}]
  %6 = xla_tuple %s3, %s4, %s5
  %s7 = sld [smem:[#allocation0]]
  $region54: #{tpu_custom_call.1} parent=0
    _
  %s9 = ssub.s32 1, %s7
  %s10 = scalar_select 0, %s9, %s7
  $region1: #{tpu_custom_call.1} parent=0
    #allocation2 [shape = 'u8[512]{0}', space=vmem, size = 0x400, scoped, tag = 'input window, operand 0, single buffered']
    #allocation3 [shape = 's32[1]{0}', space=sflag, size = 0x4, scoped, tag = 'scoped memory for tpu_custom_call.1']
    #allocation4 [shape = 's32[1]{0}', space=sflag, size = 0x4, scoped, tag = 'scoped memory for tpu_custom_call.1']
    #allocation5 [shape = 'u8[8192]{0}', space=vmem, size = 0x2000, scoped, tag = 'input window, operand 1, single buffered']
    #allocation6 [shape = 's32[1]{0}', space=sflag, size = 0x4, scoped, tag = 'scoped memory for tpu_custom_call.1']
    #allocation7 [shape = 'u8[8192]{0}', space=vmem, size = 0x2000, scoped, tag = 'input window, operand 2, single buffered']
    #allocation8 [shape = 'u8[4096]{0}', space=vmem, size = 0x1000, scoped, tag = 'output window, operand 0, single buffered']
    #allocation9 [shape = 'u8[4096]{0}', space=vmem, size = 0x1000, scoped, tag = 'output window, operand 1, single buffered']
    #allocation10 [shape = 's32[1]{0}', space=sflag, size = 0x4, scoped, tag = 'scoped memory for tpu_custom_call.1']
    #allocation11 [shape = 'u8[4096]{0}', space=vmem, size = 0x1000, scoped, tag = 'output window, operand 2, single buffered']
    %11 = vsyncpa [#allocation3], 0
    %12 = vsyncpa [#allocation6], 0
    %13 = vsyncpa [#allocation4], 0
    %14 = vsyncpa [#allocation10], 0
    // Predicated region
    $region2: #{tpu_custom_call.1} parent=1 // pred_check
      _
    $region3: #{tpu_custom_call.1} parent=1 // pred_check_branch
      %16 = sbr.rel (0) target = $region5
    $region4: #{tpu_custom_call.1} parent=1 // pred_region
      %s18 = ssub.s32 16, 16
      %19 = vsyncadd [#allocation3], %s18
      %s21 = sshll.u32 [#allocation2], 4
      %s22 = int_to_ptr.vmem [resolvable:$true] %s21
      %24 = dma.hbm_to_vmem [thread:$0]  %s0, 16, %s22, [#allocation3]
    $region5: #{tpu_custom_call.1} parent=1 // pred_fallthru
      _
    // Predicated region
    $region6: #{tpu_custom_call.1} parent=1 // pred_check
      _
    $region7: #{tpu_custom_call.1} parent=1 // pred_check_branch
      %26 = sbr.rel (0) target = $region9
    $region8: #{tpu_custom_call.1} parent=1 // pred_region
      %s27 = sadd.s32 0, 0
      %p28 = scmp.lt.s32.totalorder %s27, 0
      %s29 = scalar_select %p28, %s27, 0
      %s30 = smul.u32 2, %s29
      %s32 = ssub.s32 256, 256
      %33 = vsyncadd [#allocation6], %s32
      %s34 = smul.addr %s30, 128
      %s35 = scalar_lea.hbm %s1, %s34
      %s36 = sshll.u32 [#allocation5], 4
      %s37 = int_to_ptr.vmem [resolvable:$true] %s36
      %42 = dma.hbm_to_vmem [thread:$0]  %s35, 256, %s37, [#allocation6], 128, 128, 8
    $region9: #{tpu_custom_call.1} parent=1 // pred_fallthru
      _
    // Predicated region
    $region10: #{tpu_custom_call.1} parent=1 // pred_check
      _
    $region11: #{tpu_custom_call.1} parent=1 // pred_check_branch
      %44 = sbr.rel (0) target = $region13
    $region12: #{tpu_custom_call.1} parent=1 // pred_region
      %s45 = sadd.s32 0, 0
      %p46 = scmp.lt.s32.totalorder %s45, 0
      %s47 = scalar_select %p46, %s45, 0
      %s48 = smul.u32 2, %s47
      %s50 = ssub.s32 256, 256
      %51 = vsyncadd [#allocation6], %s50
      %s52 = smul.addr %s48, 128
      %s53 = scalar_lea.hbm %s2, %s52
      %s54 = sshll.u32 [#allocation7], 4
      %s55 = int_to_ptr.vmem [resolvable:$true] %s54
      %60 = dma.hbm_to_vmem [thread:$0]  %s53, 256, %s55, [#allocation6], 128, 128, 8
    $region13: #{tpu_custom_call.1} parent=1 // pred_fallthru
      _
    // Predicated region
    $region14: #{tpu_custom_call.1} parent=1 // pred_check
      _
    $region15: #{tpu_custom_call.1} parent=1 // pred_check_branch
      %62 = sbr.rel (0) target = $region17
    $region16: #{tpu_custom_call.1} parent=1 // pred_region
      %63 = dma.done [#allocation3], 16
    $region17: #{tpu_custom_call.1} parent=1 // pred_fallthru
      _
    // Predicated region
    $region18: #{tpu_custom_call.1} parent=1 // pred_check
      _
    $region19: #{tpu_custom_call.1} parent=1 // pred_check_branch
      %65 = sbr.rel (0) target = $region21
    $region20: #{tpu_custom_call.1} parent=1 // pred_region
      %66 = dma.done [#allocation6], 256
    $region21: #{tpu_custom_call.1} parent=1 // pred_fallthru
      _
    // Predicated region
    $region22: #{tpu_custom_call.1} parent=1 // pred_check
      _
    $region23: #{tpu_custom_call.1} parent=1 // pred_check_branch
      %68 = sbr.rel (0) target = $region25
    $region24: #{tpu_custom_call.1} parent=1 // pred_region
      %69 = dma.done [#allocation6], 256
    $region25: #{tpu_custom_call.1} parent=1 // pred_fallthru
      _
    %s70 = sadd.s32 0, 0
    %p71 = scmp.lt.s32.totalorder %s70, 0
    %s72 = scalar_select %p71, %s70, 0
    %s73 = smul.u32 2, %s72
    %s74 = sadd.s32 0, 0
    %p75 = scmp.lt.s32.totalorder %s74, 0
    %s76 = scalar_select %p75, %s74, 0
    %s77 = smul.u32 2, %s76
    %p78 = scmp.eq.s32.totalorder 0, 0
    // Predicated region
    $region26: #{tpu_custom_call.1} parent=1 // pred_check
      %p79 = pneg %p78
    $region27: #{tpu_custom_call.1} parent=1 // pred_check_branch
      %81 = sbr.rel (%p79) target = $region29
    $region28: #{tpu_custom_call.1} parent=1 // pred_region
      %82 = vst [vmem:[#allocation8] sm:$0xff] 0.0
      %83 = vst [vmem:[#allocation9] sm:$0xff] 0.0
      %84 = vst [vmem:[#allocation11] sm:$0xff] 0.0
    $region29: #{tpu_custom_call.1} parent=1 // pred_fallthru
      _
    %v85 = vld [vmem:[#allocation5] sm:$0xff]
    %v86 = vld [vmem:[#allocation5 + $0x8] sm:$0xff]
    %v87 = vld [vmem:[#allocation7] sm:$0xff]
    %v88 = vld [vmem:[#allocation7 + $0x8] sm:$0xff]
    %v89 = vld [vmem:[#allocation2] sm:$0x1]
    %v91 = vlaneseq
    %v92 = vshrl.u32 %v91, 7
    %v93 = vsub.s32 0, %v92
    %v94 = vrot.slane %v89, %v93
    %v96 = vsub.f32 %v87, %v94
    %v97 = vsub.f32 %v88, %v94
    %v98 = vsub.f32 %v85, %v87
    %v99 = vsub.f32 %v86, %v88
    %v100 = vld [vmem:[#allocation8] sm:$0xff]
    %v101 = vadd.f32 %v96, %v97
    %v102 = vadd.f32 %v100, %v101
    %103 = vst [vmem:[#allocation8] sm:$0xff] %v102
    %v104 = vld [vmem:[#allocation9] sm:$0xff]
    %v105 = vmul.f32 %v96, %v96
    %v106 = vmul.f32 %v97, %v97
    %v107 = vadd.f32 %v105, %v106
    %v108 = vadd.f32 %v104, %v107
    %109 = vst [vmem:[#allocation9] sm:$0xff] %v108
    %v110 = vld [vmem:[#allocation11] sm:$0xff]
    %v111 = vmul.f32 %v98, %v98
    %v112 = vmul.f32 %v99, %v99
    %v113 = vadd.f32 %v111, %v112
    %v114 = vadd.f32 %v110, %v113
    %115 = vst [vmem:[#allocation11] sm:$0xff] %v114
    // Predicated region
    $region30: #{tpu_custom_call.1} parent=1 // pred_check
      _
    $region31: #{tpu_custom_call.1} parent=1 // pred_check_branch
      %117 = sbr.rel (0) target = $region33
    $region32: #{tpu_custom_call.1} parent=1 // pred_region
      %s119 = ssub.s32 128, 128
      %120 = vsyncadd [#allocation4], %s119
      %s122 = sshll.u32 [#allocation8], 4
      %s123 = int_to_ptr.vmem [resolvable:$true] %s122
      %125 = dma.vmem_to_hbm [thread:$0]  %s123, 128, %s3, [#allocation4]
    $region33: #{tpu_custom_call.1} parent=1 // pred_fallthru
      _
    // Predicated region
    $region34: #{tpu_custom_call.1} parent=1 // pred_check
      _
    $region35: #{tpu_custom_call.1} parent=1 // pred_check_branch
      %127 = sbr.rel (0) target = $region37
    $region36: #{tpu_custom_call.1} parent=1 // pred_region
      %s129 = ssub.s32 128, 128
      %130 = vsyncadd [#allocation10], %s129
      %s132 = sshll.u32 [#allocation9], 4
      %s133 = int_to_ptr.vmem [resolvable:$true] %s132
      %135 = dma.vmem_to_hbm [thread:$0]  %s133, 128, %s4, [#allocation10]
    $region37: #{tpu_custom_call.1} parent=1 // pred_fallthru
      _
    // Predicated region
    $region38: #{tpu_custom_call.1} parent=1 // pred_check
      _
    $region39: #{tpu_custom_call.1} parent=1 // pred_check_branch
      %137 = sbr.rel (0) target = $region41
    $region40: #{tpu_custom_call.1} parent=1 // pred_region
      %s139 = ssub.s32 128, 128
      %140 = vsyncadd [#allocation10], %s139
      %s142 = sshll.u32 [#allocation11], 4
      %s143 = int_to_ptr.vmem [resolvable:$true] %s142
      %145 = dma.vmem_to_hbm [thread:$0]  %s143, 128, %s5, [#allocation10]
    $region41: #{tpu_custom_call.1} parent=1 // pred_fallthru
      _
    // Predicated region
    $region42: #{tpu_custom_call.1} parent=1 // pred_check
      _
    $region43: #{tpu_custom_call.1} parent=1 // pred_check_branch
      %147 = sbr.rel (0) target = $region45
    $region44: #{tpu_custom_call.1} parent=1 // pred_region
      %148 = dma.done [#allocation4], 128
    $region45: #{tpu_custom_call.1} parent=1 // pred_fallthru
      _
    // Predicated region
    $region46: #{tpu_custom_call.1} parent=1 // pred_check
      _
    $region47: #{tpu_custom_call.1} parent=1 // pred_check_branch
      %150 = sbr.rel (0) target = $region49
    $region48: #{tpu_custom_call.1} parent=1 // pred_region
      %151 = dma.done [#allocation10], 128
    $region49: #{tpu_custom_call.1} parent=1 // pred_fallthru
      _
    // Predicated region
    $region50: #{tpu_custom_call.1} parent=1 // pred_check
      _
    $region51: #{tpu_custom_call.1} parent=1 // pred_check_branch
      %153 = sbr.rel (0) target = $region53
    $region52: #{tpu_custom_call.1} parent=1 // pred_region
      %154 = dma.done [#allocation10], 128
    $region53: #{tpu_custom_call.1} parent=1 // pred_fallthru
      _
    %155 = vsyncpa [#allocation3], 1
    %156 = vsyncpa [#allocation6], 1
    %157 = vsyncpa [#allocation4], 1
    %158 = vsyncpa [#allocation10], 1

</llo_original>
